<compile_context>
chip_gen: v7x
topology: tpu7x:2x2x1
jax: 0.10.0
libtpu: 0.0.40
codegen_flags: <defaults>
</compile_context>

<pallas_src>
import re

import jax
import jax.numpy as jnp
from jax import lax
from jax.experimental import pallas as pl
from jax.experimental.pallas import tpu as pltpu


def _round_up(x: int, m: int) -> int:
    return ((x + m - 1) // m) * m


def _cdiv(a: int, b: int) -> int:
    return (a + b - 1) // b


def _tpu_generation_and_vmem():
    """Best-effort TPU generation + physical VMEM query (safe fallbacks)."""
    gen, phys = 6, None
    try:
        kind = jax.devices()[0].device_kind
        m = re.search(r"(\d+)", kind)
        if m:
            gen = int(m.group(1))
    except Exception:
        pass
    try:
        phys = int(pltpu.get_tpu_info().vmem_capacity_bytes)
    except Exception:
        phys = None
    return gen, phys


# ---------------------------------------------------------------------------
# Fused single pass: matmul + bias + online logsumexp + renormalize.
# The raw f32 logits for the whole vocab row stay resident in a VMEM scratch
# across vocab tiles; the last vocab step subtracts the lse and writes the
# (tm, V) log-prob block once -> no intermediate HBM logits round-trip.
# ---------------------------------------------------------------------------
def _make_fused_kernel(n_vocab_tiles, tv, v_total, needs_col_mask):
    def kernel(x_ref, w_ref, b_ref, o_ref, acc_ref, m_sc, l_sc):
        j = pl.program_id(1)

        @pl.when(j == 0)
        def _init():
            m_sc[...] = jnp.full_like(m_sc, -jnp.inf)
            l_sc[...] = jnp.zeros_like(l_sc)

        # MXU matmul with f32 accumulation; bias is f32.
        logits = jnp.dot(x_ref[...], w_ref[...],
                         preferred_element_type=jnp.float32) + b_ref[...]
        if needs_col_mask:
            # Partial last vocab tile: neutralize out-of-range columns so the
            # online logsumexp never sees garbage from the boundary block.
            col = j * tv + lax.broadcasted_iota(jnp.int32, logits.shape, 1)
            logits = jnp.where(col < v_total, logits, -1e30)

        start = pl.multiple_of(j * tv, tv)
        acc_ref[:, pl.ds(start, tv)] = logits

        # Online (flash-style) logsumexp across vocab tiles.
        m_prev = m_sc[...]
        m_new = jnp.maximum(m_prev, jnp.max(logits, axis=-1, keepdims=True))
        l_sc[...] = (l_sc[...] * jnp.exp(m_prev - m_new)
                     + jnp.sum(jnp.exp(logits - m_new), axis=-1, keepdims=True))
        m_sc[...] = m_new

        @pl.when(j == n_vocab_tiles - 1)
        def _finalize():
            lse = m_sc[...] + jnp.log(l_sc[...])
            o_ref[...] = (acc_ref[:, :v_total] - lse).astype(o_ref.dtype)

    return kernel


# ---------------------------------------------------------------------------
# Two-pass fallback (large vocab): pass 1 writes f32 logits + per-row lse.
# ---------------------------------------------------------------------------
def _make_pass1_kernel(tv, v_total, needs_col_mask):
    def kernel(x_ref, w_ref, b_ref, logits_ref, lse_ref, m_sc, l_sc):
        j = pl.program_id(1)

        @pl.when(j == 0)
        def _init():
            m_sc[...] = jnp.full_like(m_sc, -jnp.inf)
            l_sc[...] = jnp.zeros_like(l_sc)

        logits = jnp.dot(x_ref[...], w_ref[...],
                         preferred_element_type=jnp.float32) + b_ref[...]
        if needs_col_mask:
            col = j * tv + lax.broadcasted_iota(jnp.int32, logits.shape, 1)
            logits = jnp.where(col < v_total, logits, -1e30)
        logits_ref[...] = logits

        m_prev = m_sc[...]
        m_new = jnp.maximum(m_prev, jnp.max(logits, axis=-1, keepdims=True))
        l_sc[...] = (l_sc[...] * jnp.exp(m_prev - m_new)
                     + jnp.sum(jnp.exp(logits - m_new), axis=-1, keepdims=True))
        m_sc[...] = m_new

        @pl.when(j == pl.num_programs(1) - 1)
        def _fin():
            lse_ref[...] = m_sc[...] + jnp.log(l_sc[...])

    return kernel


def _renorm_kernel(logits_ref, lse_ref, o_ref):
    o_ref[...] = (logits_ref[...] - lse_ref[...]).astype(o_ref.dtype)


def projection_layer(x, weight, bias, *, tm=None, tv=None,
                     compute_dtype=jnp.bfloat16, fuse=None):
    """log_softmax(x @ weight + bias, axis=-1)  (== torch ProjectionLayer).

    x: (B, S, D); weight: (D, V) (transposed vs torch nn.Linear.weight);
    bias: (V,). Returns (B, S, V) log-probs in x.dtype.
    tm/tv: row / vocab tile (None -> generation-aware defaults).
    fuse: None = auto (fuse when the (tm, V) logits slab fits VMEM).
    """
    B, S, D = x.shape
    V = weight.shape[1]
    M = B * S
    out_dtype = x.dtype

    gen, phys_vmem = _tpu_generation_and_vmem()
    # Arithmetic-intensity targets (flops/byte of weight streaming): need
    # tm >= ~240 on v5e, ~650 on v6e, ~310 on v7x to be MXU- not HBM-bound.
    if tm is None:
        tm = 512 if gen >= 7 else (1024 if gen == 6 else 256)
    if tv is None:
        tv = 512  # multiple of 256 -> full MXU tiles on v6e/v7x.
    # VMEM budget: ~48 MiB on v7x (64 MiB physical per TC), ~100 MiB otherwise.
    cap = 48 * 2**20 if gen >= 7 else 100 * 2**20
    if phys_vmem:
        cap = min(cap, int(phys_vmem * 0.75))

    row_align = 16  # bf16 packs 16 sublanes per vreg; also valid for f32.
    tm_eff = max(row_align, min(_round_up(tm, row_align), _round_up(M, row_align)))
    tv_eff = max(128, min(_round_up(tv, 128), _round_up(V, 128)))

    # v7x has 2 TensorCores sharing the "parallel" row axis: avoid a single
    # giant row tile when the rows could be split across both cores.
    if gen >= 7 and _cdiv(M, tm_eff) == 1 and M >= 2 * row_align:
        tm_eff = min(tm_eff, _round_up(_cdiv(M, 2), row_align))

    in_sz = jnp.dtype(compute_dtype).itemsize
    w_sz = in_sz
    out_sz = jnp.dtype(out_dtype).itemsize

    def vmem_est(tm_, tv_, fused):
        nj_ = _cdiv(V, tv_)
        b = 2 * tm_ * D * in_sz                       # x tile (double buffered)
        b += 2 * D * tv_ * w_sz                       # weight tile
        b += 2 * 8 * _round_up(tv_, 128) * 4          # bias tile (padded)
        b += 2 * tm_ * 128 * 4                        # m/l scratch (lane pad)
        if fused:
            b += nj_ * tv_ * tm_ * 4                  # resident f32 logits
            b += 2 * tm_ * _round_up(V, 128) * out_sz  # resident out block
        else:
            b += 2 * tm_ * tv_ * 4                    # f32 logits out tile
            b += 4 * 8 * 128 * 4                      # lse out tile (tiny)
        return b

    # Shrink tiles until the (fallback) two-pass footprint fits the budget.
    while vmem_est(tm_eff, tv_eff, False) > cap:
        if tm_eff > row_align:
            tm_eff = max(row_align, _round_up(tm_eff // 2, row_align))
        elif tv_eff > 128:
            tv_eff = max(128, _round_up(tv_eff // 2, 128))
        else:
            break

    nj = _cdiv(V, tv_eff)
    n_row = _cdiv(M, tm_eff)
    needs_col_mask = (V % tv_eff) != 0
    if fuse is None:
        fuse = vmem_est(tm_eff, tv_eff, True) <= cap

    # Only small wrapper-side casts: x (M x D) and bias. The (large) weight is
    # used as-is when it already matches compute_dtype -- for production keep
    # the LM-head weight in bf16 upstream so no full-size copy is ever made.
    x2d = x.reshape(M, D)
    if x2d.dtype != compute_dtype:
        x2d = x2d.astype(compute_dtype)
    w = weight if weight.dtype == compute_dtype else weight.astype(compute_dtype)
    b2d = bias.reshape(1, V).astype(jnp.float32)

    grid = (n_row, nj)
    flops = 2 * M * D * V
    transc = M * V
    in_specs = [
        pl.BlockSpec((tm_eff, D), lambda i, j: (i, 0)),   # x row tile
        pl.BlockSpec((D, tv_eff), lambda i, j: (0, j)),   # weight tile (streams)
        pl.BlockSpec((1, tv_eff), lambda i, j: (0, j)),   # bias tile (f32)
    ]

    if fuse:
        est = vmem_est(tm_eff, tv_eff, True)
        vmem_limit = int(min(cap, max(est + est // 4, 4 * 2**20)))
        cost = pl.CostEstimate(
            flops=int(flops), transcendentals=int(transc),
            bytes_accessed=int(M * D * in_sz + n_row * D * V * w_sz
                               + V * 4 + M * V * out_sz))
        out2d = pl.pallas_call(
            _make_fused_kernel(nj, tv_eff, V, needs_col_mask),
            out_shape=jax.ShapeDtypeStruct((M, V), out_dtype),
            grid_spec=pltpu.PrefetchScalarGridSpec(
                num_scalar_prefetch=0,
                grid=grid,
                in_specs=in_specs,
                out_specs=pl.BlockSpec((tm_eff, V), lambda i, j: (i, 0)),
                scratch_shapes=[
                    pltpu.VMEM((tm_eff, nj * tv_eff), jnp.float32),  # logits
                    pltpu.VMEM((tm_eff, 1), jnp.float32),            # running max
                    pltpu.VMEM((tm_eff, 1), jnp.float32),            # running sum
                ],
            ),
            compiler_params=pltpu.CompilerParams(
                dimension_semantics=("parallel", "arbitrary"),
                vmem_limit_bytes=vmem_limit,
            ),
            cost_estimate=cost,
        )(x2d, w, b2d)
        return out2d.reshape(B, S, V)

    # -------------------- two-pass fallback (large vocab) --------------------
    est = vmem_est(tm_eff, tv_eff, False)
    vmem_limit = int(min(cap, max(est + est // 4, 4 * 2**20)))
    cost = pl.CostEstimate(
        flops=int(flops), transcendentals=int(transc),
        bytes_accessed=int(M * D * in_sz + n_row * D * V * w_sz
                           + V * 4 + M * V * 4 + M * 4))
    logits, lse = pl.pallas_call(
        _make_pass1_kernel(tv_eff, V, needs_col_mask),
        out_shape=(jax.ShapeDtypeStruct((M, V), jnp.float32),
                   jax.ShapeDtypeStruct((M, 1), jnp.float32)),
        grid_spec=pltpu.PrefetchScalarGridSpec(
            num_scalar_prefetch=0,
            grid=grid,
            in_specs=in_specs,
            out_specs=[
                pl.BlockSpec((tm_eff, tv_eff), lambda i, j: (i, j)),  # logits
                pl.BlockSpec((tm_eff, 1), lambda i, j: (i, 0)),       # lse
            ],
            scratch_shapes=[pltpu.VMEM((tm_eff, 1), jnp.float32),
                            pltpu.VMEM((tm_eff, 1), jnp.float32)],
        ),
        compiler_params=pltpu.CompilerParams(
            dimension_semantics=("parallel", "arbitrary"),
            vmem_limit_bytes=vmem_limit,
        ),
        cost_estimate=cost,
    )(x2d, w, b2d)

    # Pass 2: pure streaming renormalize with large lane-dense tiles, both
    # axes parallel; alias the f32 logits buffer as the output when possible.
    tm2 = min(256, _round_up(M, 8))
    tv2 = min(2048, _round_up(V, 128))
    alias = {0: 0} if out_dtype == jnp.float32 else {}
    p2_bytes = 2 * tm2 * tv2 * (4 + out_sz) + 4 * 8 * 128 * 4
    out2d = pl.pallas_call(
        _renorm_kernel,
        out_shape=jax.ShapeDtypeStruct((M, V), out_dtype),
        grid_spec=pltpu.PrefetchScalarGridSpec(
            num_scalar_prefetch=0,
            grid=(_cdiv(M, tm2), _cdiv(V, tv2)),
            in_specs=[
                pl.BlockSpec((tm2, tv2), lambda i, j: (i, j)),
                pl.BlockSpec((tm2, 1), lambda i, j: (i, 0)),
            ],
            out_specs=pl.BlockSpec((tm2, tv2), lambda i, j: (i, j)),
        ),
        compiler_params=pltpu.CompilerParams(
            dimension_semantics=("parallel", "parallel"),
            vmem_limit_bytes=int(min(cap, max(p2_bytes + p2_bytes // 4,
                                              4 * 2**20))),
        ),
        input_output_aliases=alias,
    )(logits, lse)
    return out2d.reshape(B, S, V)


if __name__ == "__main__":
    # Small shapes consistent with the module; chosen so that the partial
    # row tile, the partial vocab tile (in-kernel column mask), the fused
    # single-pass path and the two-pass fallback are all exercised.
    batch, seq, d_model, vocab = 2, 13, 128, 640

    key = jax.random.PRNGKey(0)
    kx, kw, kb = jax.random.split(key, 3)

    x = jax.random.normal(kx, (batch, seq, d_model), dtype=jnp.float32)
    # deterministic "Linear" params, stored as (D, V) (transposed vs PyTorch)
    weight = jax.random.normal(kw, (d_model, vocab), dtype=jnp.float32) * 0.02
    bias = jax.random.normal(kb, (vocab,), dtype=jnp.float32) * 0.01

    # References.
    logits_f32 = x.reshape(-1, d_model) @ weight + bias
    ref_f32 = jax.nn.log_softmax(logits_f32, axis=-1).reshape(batch, seq, vocab)
    xb = x.reshape(-1, d_model).astype(jnp.bfloat16)
    wb = weight.astype(jnp.bfloat16)
    logits_bf = jnp.dot(xb, wb, preferred_element_type=jnp.float32) + bias
    ref_bf16 = jax.nn.log_softmax(logits_bf, -1).reshape(batch, seq, vocab)

    # 1) Defaults -> fused single-pass kernel, bf16 MXU, f32 accum, f32 output.
    out = jax.block_until_ready(projection_layer(x, weight, bias))
    assert out.shape == (batch, seq, vocab)
    assert out.dtype == x.dtype
    assert jnp.allclose(out, ref_bf16, atol=2e-3, rtol=2e-3)
    # log-probs must exponentiate to a normalized distribution
    row_sums = jnp.exp(out.astype(jnp.float32)).sum(axis=-1)
    assert jnp.allclose(row_sums, 1.0, atol=1e-3)

    # 2) Forced two-pass fallback (pass-2 output aliased onto the f32 logits
    #    buffer), multi-tile on both axes, exact vocab tiling (no column mask).
    out2 = jax.block_until_ready(
        projection_layer(x, weight, bias, tm=16, tv=128, fuse=False))
    assert jnp.allclose(out2, ref_bf16, atol=2e-3, rtol=2e-3)

    # 3) Fused path with a partial last vocab tile (in-kernel column mask),
    #    f32 compute path.
    out3 = jax.block_until_ready(
        projection_layer(x, weight, bias, tm=64, tv=256,
                         compute_dtype=jnp.float32, fuse=True))
    assert jnp.allclose(out3, ref_f32, atol=2e-3, rtol=2e-3)

    # 4) bf16 activations/weight/output, two-pass path without aliasing.
    out4 = jax.block_until_ready(
        projection_layer(x.astype(jnp.bfloat16), weight.astype(jnp.bfloat16),
                         bias, tm=32, tv=256, fuse=False))
    assert out4.dtype == jnp.bfloat16
    assert jnp.allclose(out4.astype(jnp.float32), ref_bf16, atol=6e-2, rtol=0)

    print("KERNEL_OK")
</pallas_src>

<mosaic_0001>
module attributes {stable_mosaic.version = 11 : i64} {
  func.func @kernel(%arg0: i32, %arg1: i32, %arg2: memref<32x128xbf16, #tpu.memory_space<vmem>>, %arg3: memref<128x512xbf16, #tpu.memory_space<vmem>>, %arg4: memref<1x512xf32, #tpu.memory_space<vmem>>, %arg5: memref<32x640xf32, #tpu.memory_space<vmem>>, %arg6: memref<32x1024xf32, #tpu.memory_space<vmem>>, %arg7: memref<32x1xf32, #tpu.memory_space<vmem>>, %arg8: memref<32x1xf32, #tpu.memory_space<vmem>>) attributes {dimension_semantics = [#tpu.dimension_semantics<parallel>, #tpu.dimension_semantics<arbitrary>], iteration_bounds = array<i64: 1, 2>, scalar_prefetch = 0 : i64, scratch_operands = 3 : i64, tpu.core_type = #tpu.core_type<tc>, window_params = [{transform_indices = @transform_0, window_bounds = array<i64: 32, 128>}, {transform_indices = @transform_1, window_bounds = array<i64: 128, 512>}, {transform_indices = @transform_2, window_bounds = array<i64: 1, 512>}, {transform_indices = @transform_3, window_bounds = array<i64: 32, 640>}]} {
    %c0_i32 = arith.constant 0 : i32
    %0 = arith.cmpi eq, %arg1, %c0_i32 : i32
    %1 = arith.extui %0 : i1 to i32
    %c0_i32_0 = arith.constant 0 : i32
    %2 = arith.cmpi ne, %1, %c0_i32_0 : i32
    scf.if %2 {
      %cst_20 = arith.constant 0xFF800000 : f32
      %40 = vector.broadcast %cst_20 : f32 to vector<32x1xf32>
      %c0_21 = arith.constant 0 : index
      %c0_22 = arith.constant 0 : index
      %41 = vector.load %arg7[%c0_21, %c0_22] : memref<32x1xf32, #tpu.memory_space<vmem>>, vector<32x1xf32>
      tpu.vector_store %arg7[%c0_21, %c0_22], %40 {strides = array<i32>} : memref<32x1xf32, #tpu.memory_space<vmem>>, vector<32x1xf32>,
      %cst_23 = arith.constant 0.000000e+00 : f32
      %42 = vector.broadcast %cst_23 : f32 to vector<32x1xf32>
      %c0_24 = arith.constant 0 : index
      %c0_25 = arith.constant 0 : index
      %43 = vector.load %arg8[%c0_24, %c0_25] : memref<32x1xf32, #tpu.memory_space<vmem>>, vector<32x1xf32>
      tpu.vector_store %arg8[%c0_24, %c0_25], %42 {strides = array<i32>} : memref<32x1xf32, #tpu.memory_space<vmem>>, vector<32x1xf32>,
    } else {
    }
    %c0 = arith.constant 0 : index
    %c0_1 = arith.constant 0 : index
    %3 = vector.load %arg2[%c0, %c0_1] : memref<32x128xbf16, #tpu.memory_space<vmem>>, vector<32x128xbf16>
    %c0_2 = arith.constant 0 : index
    %c0_3 = arith.constant 0 : index
    %4 = vector.load %arg3[%c0_2, %c0_3] : memref<128x512xbf16, #tpu.memory_space<vmem>>, vector<128x512xbf16>
    %cst = arith.constant dense<0.000000e+00> : vector<32x512xf32>
    %5 = tpu.matmul %3, %4, %cst {dimension_numbers = #tpu.dot_dimension_numbers<[1], [0], [0], [1], [0, 0, 1, 1], [], []>} : vector<32x128xbf16>, vector<128x512xbf16>, vector<32x512xf32> -> vector<32x512xf32>
    %c0_4 = arith.constant 0 : index
    %c0_5 = arith.constant 0 : index
    %6 = vector.load %arg4[%c0_4, %c0_5] : memref<1x512xf32, #tpu.memory_space<vmem>>, vector<1x512xf32>
    %7 = vector.broadcast %6 : vector<1x512xf32> to vector<32x512xf32>
    %8 = arith.addf %5, %7 : vector<32x512xf32>
    %c512_i32 = arith.constant 512 : i32
    %9 = arith.muli %arg1, %c512_i32 : i32
    %10 = tpu.iota {dimensions = array<i32: 1>} : vector<32x512xi32>
    %11 = vector.broadcast %9 : i32 to vector<32x512xi32>
    %12 = arith.addi %11, %10 : vector<32x512xi32>
    %c640_i32 = arith.constant 640 : i32
    %13 = vector.broadcast %c640_i32 : i32 to vector<32x512xi32>
    %14 = arith.cmpi slt, %12, %13 : vector<32x512xi32>
    %cst_6 = arith.constant -1.000000e+30 : f32
    %15 = vector.broadcast %cst_6 : f32 to vector<32x512xf32>
    %16 = arith.select %14, %8, %15 : vector<32x512xi1>, vector<32x512xf32>
    %c512_i32_7 = arith.constant 512 : i32
    %17 = arith.muli %arg1, %c512_i32_7 : i32
    %18 = tpu.assume_multiple %17, 512 : i32
    %c0_8 = arith.constant 0 : index
    %19 = arith.index_cast %18 : i32 to index
    %20 = vector.load %arg6[%c0_8, %19] : memref<32x1024xf32, #tpu.memory_space<vmem>>, vector<32x512xf32>
    tpu.vector_store %arg6[%c0_8, %19], %16 {strides = array<i32>} : memref<32x1024xf32, #tpu.memory_space<vmem>>, vector<32x512xf32>,
    %c0_9 = arith.constant 0 : index
    %c0_10 = arith.constant 0 : index
    %21 = vector.load %arg7[%c0_9, %c0_10] : memref<32x1xf32, #tpu.memory_space<vmem>>, vector<32x1xf32>
    %cst_11 = arith.constant dense<0xFF800000> : vector<32xf32>
    %22 = vector.multi_reduction <maximumf>, %16, %cst_11 [1] : vector<32x512xf32> to vector<32xf32>
    %23 = vector.shape_cast %22 : vector<32xf32> to vector<32x1xf32>
    %24 = arith.maximumf %21, %23 : vector<32x1xf32>
    %c0_12 = arith.constant 0 : index
    %c0_13 = arith.constant 0 : index
    %25 = vector.load %arg8[%c0_12, %c0_13] : memref<32x1xf32, #tpu.memory_space<vmem>>, vector<32x1xf32>
    %26 = arith.subf %21, %24 : vector<32x1xf32>
    %27 = math.exp %26 : vector<32x1xf32>
    %28 = arith.mulf %25, %27 : vector<32x1xf32>
    %29 = vector.broadcast %24 : vector<32x1xf32> to vector<32x512xf32>
    %30 = arith.subf %16, %29 : vector<32x512xf32>
    %31 = math.exp %30 : vector<32x512xf32>
    %cst_14 = arith.constant dense<0.000000e+00> : vector<32xf32>
    %32 = vector.multi_reduction <add>, %31, %cst_14 [1] : vector<32x512xf32> to vector<32xf32>
    %33 = vector.shape_cast %32 : vector<32xf32> to vector<32x1xf32>
    %34 = arith.addf %28, %33 : vector<32x1xf32>
    %c0_15 = arith.constant 0 : index
    %c0_16 = arith.constant 0 : index
    %35 = vector.load %arg8[%c0_15, %c0_16] : memref<32x1xf32, #tpu.memory_space<vmem>>, vector<32x1xf32>
    tpu.vector_store %arg8[%c0_15, %c0_16], %34 {strides = array<i32>} : memref<32x1xf32, #tpu.memory_space<vmem>>, vector<32x1xf32>,
    %c0_17 = arith.constant 0 : index
    %c0_18 = arith.constant 0 : index
    %36 = vector.load %arg7[%c0_17, %c0_18] : memref<32x1xf32, #tpu.memory_space<vmem>>, vector<32x1xf32>
    tpu.vector_store %arg7[%c0_17, %c0_18], %24 {strides = array<i32>} : memref<32x1xf32, #tpu.memory_space<vmem>>, vector<32x1xf32>,
    %c1_i32 = arith.constant 1 : i32
    %37 = arith.cmpi eq, %arg1, %c1_i32 : i32
    %38 = arith.extui %37 : i1 to i32
    %c0_i32_19 = arith.constant 0 : i32
    %39 = arith.cmpi ne, %38, %c0_i32_19 : i32
    scf.if %39 {
      %c0_20 = arith.constant 0 : index
      %c0_21 = arith.constant 0 : index
      %40 = vector.load %arg7[%c0_20, %c0_21] : memref<32x1xf32, #tpu.memory_space<vmem>>, vector<32x1xf32>
      %c0_22 = arith.constant 0 : index
      %c0_23 = arith.constant 0 : index
      %41 = vector.load %arg8[%c0_22, %c0_23] : memref<32x1xf32, #tpu.memory_space<vmem>>, vector<32x1xf32>
      %42 = math.log %41 : vector<32x1xf32>
      %43 = arith.addf %40, %42 : vector<32x1xf32>
      %c0_24 = arith.constant 0 : index
      %c0_25 = arith.constant 0 : index
      %44 = vector.load %arg6[%c0_24, %c0_25] : memref<32x1024xf32, #tpu.memory_space<vmem>>, vector<32x640xf32>
      %45 = vector.broadcast %43 : vector<32x1xf32> to vector<32x640xf32>
      %46 = arith.subf %44, %45 : vector<32x640xf32>
      %c0_26 = arith.constant 0 : index
      %c0_27 = arith.constant 0 : index
      %47 = vector.load %arg5[%c0_26, %c0_27] : memref<32x640xf32, #tpu.memory_space<vmem>>, vector<32x640xf32>
      tpu.vector_store %arg5[%c0_26, %c0_27], %46 {strides = array<i32>} : memref<32x640xf32, #tpu.memory_space<vmem>>, vector<32x640xf32>,
    } else {
    }
    return
  }
  func.func @transform_0(%arg0: i32, %arg1: i32) -> (i32, i32) {
    %c0_i32 = arith.constant 0 : i32
    %c0_i32_0 = arith.constant 0 : i32
    return %arg0, %c0_i32 : i32, i32
  }
  func.func @transform_1(%arg0: i32, %arg1: i32) -> (i32, i32) {
    %c0_i32 = arith.constant 0 : i32
    %c0_i32_0 = arith.constant 0 : i32
    return %c0_i32, %arg1 : i32, i32
  }
  func.func @transform_2(%arg0: i32, %arg1: i32) -> (i32, i32) {
    %c0_i32 = arith.constant 0 : i32
    %c0_i32_0 = arith.constant 0 : i32
    return %c0_i32, %arg1 : i32, i32
  }
  func.func @transform_3(%arg0: i32, %arg1: i32) -> (i32, i32) {
    %c0_i32 = arith.constant 0 : i32
    %c0_i32_0 = arith.constant 0 : i32
    return %arg0, %c0_i32 : i32, i32
  }
}

</mosaic_0001>

<llo_original>
// kernel: tpu_custom_call.1
$region0: #{tpu_custom_call.1}
  #allocation0 [shape = 'u32[]', space=smem, size = 0x4, offset = 0x4, fixed_abs, tag = 'smem constant byte address 0x4 - core index']
  #allocation1 [shape = 'u32[144,128]{1,0:T(1,128)}', space=vmem, size = 0x12000, scoped, tag = 'internal scratch']
  #allocation2 [shape = 'f32[32,1024]{1,0:T(8,128)}', space=vmem, size = 0x20000, scoped, tag = 'scratch operand']
  #allocation3 [shape = 'f32[32,1]{1,0:T(8,128)}', space=vmem, size = 0x4000, scoped, tag = 'scratch operand']
  #allocation4 [shape = 'f32[32,1]{1,0:T(8,128)}', space=vmem, size = 0x4000, scoped, tag = 'scratch operand']
  %s0 = inlined_call_operand.hbm [shape: bf16[26,128], index: 0, kind: input, shape index: {}]
  %s1 = inlined_call_operand.hbm [shape: bf16[128,640], index: 1, kind: input, shape index: {}]
  %s2 = inlined_call_operand.vmem [shape: f32[1,640], index: 2, kind: input, shape index: {}]
  %s3 = inlined_call_operand.hbm [shape: f32[26,640], index: 3, kind: output, shape index: {}]
  %s4 = sld [smem:[#allocation0]]
  $region61: #{tpu_custom_call.1} parent=0
    _
  %s6 = ssub.s32 1, %s4
  %s7 = scalar_select 0, %s6, %s4
  $region1: #{tpu_custom_call.1} parent=0
    #allocation5 [shape = 'u8[8192]{0}', space=vmem, size = 0x2000, scoped, tag = 'input window, operand 0, single buffered']
    #allocation6 [shape = 's32[2]{0}', space=sflag, size = 0x8, scoped, tag = 'scoped memory for tpu_custom_call.1']
    #allocation7 [shape = 's32[2]{0}', space=sflag, size = 0x8, scoped, tag = 'scoped memory for tpu_custom_call.1']
    #allocation8 [shape = 'u8[262144]{0}', space=vmem, size = 0x40000, scoped, tag = 'input window, operand 1']
    #allocation9 [shape = 's32[2]{0}', space=sflag, size = 0x8, scoped, tag = 'scoped memory for tpu_custom_call.1']
    #allocation10 [shape = 'u8[81920]{0}', space=vmem, size = 0x14000, scoped, tag = 'output window, operand 0, single buffered']
    %8 = vsyncpa [#allocation6], 0
    %9 = vsyncpa [#allocation9], 0
    %s10 = scalar_lea.sflag [#allocation9], 1
    %11 = vsyncpa %s10, 0
    %12 = vsyncpa [#allocation7], 0
    loop: start=0, step=1, limit=4
    $region2: #{tpu_custom_call.1} parent=1 // loop_pre_header
      _
    $region3: #{tpu_custom_call.1} parent=1 // loop_header
      %s14 = sphi 0, %s18
      %p15 = scmp.ge.s32.totalorder %s14, 4
      %s21 = sphi 0, %s33
      %s22 = sphi 0, %s29
      %s23 = sphi 0, %s21
      %s24 = sphi 0, %s22
      %s25 = sphi 0, %s23
      %s26 = sphi 0, %s24
      %s36 = sphi 0, %s38
      %s39 = sphi 0, %s36
      %s40 = sphi 0, %s39
      %s56 = sphi 0, %s40
      %s62 = sphi 0, %s64
      %s65 = sphi 0, %s62
      %s66 = sphi 0, %s65
      %s82 = sphi 0, %s66
      %s88 = sphi 0, %s90
      %s91 = sphi 0, %s88
      %s92 = sphi 0, %s91
      %s108 = sphi 0, %s92
      %s114 = sphi 0, %s116
      %s117 = sphi 0, %s114
      %s118 = sphi 0, %s117
      %s134 = sphi 0, %s118
    $region4: #{tpu_custom_call.1} parent=1 // loop_header_branch
      %17 = sbr.rel (%p15) target = $region8
    $region5: #{tpu_custom_call.1} parent=1 // loop_body
      %s19 = ssub.s32 %s14, 1
      %s20 = ssub.s32 %s14, 2
      %s27 = sadd.s32 1, %s22
      %p28 = scmp.ge.s32.totalorder %s27, 2
      %s29 = scalar_select %p28, 0, %s27
      %s30 = sadd.s32 1, %s21
      %s31 = scalar_select %p28, %s30, %s21
      %p32 = scmp.ge.s32.totalorder %s31, 1
      %s33 = scalar_select %p32, 0, %s31
      %s34 = ssub.s32 %s21, %s33
      %p35 = scmp.eq.s32.totalorder %s34, 0
      %s37 = sadd.s32 %s36, 1
      %s38 = scalar_select %p35, %s36, %s37
      %p41 = pneg %p35
      %p42 = scmp.eq.s32.totalorder %s14, 1
      %p43 = por %p41, %p42
      %p44 = scmp.ne.s32.totalorder %s36, %s39
      %p45 = scmp.eq.s32.totalorder %s14, 0
      %p46 = por %p44, %p45
      %p47 = scmp.ne.s32.totalorder %s36, %s39
      %p48 = scmp.eq.s32.totalorder %s19, 1
      %p49 = por %p47, %p48
      %p50 = scmp.ne.s32.totalorder %s39, %s40
      %p51 = scmp.eq.s32.totalorder %s19, 0
      %p52 = por %p50, %p51
      %p53 = scmp.ne.s32.totalorder %s39, %s40
      %p54 = scmp.eq.s32.totalorder %s20, 1
      %p55 = por %p53, %p54
      %p57 = scmp.ne.s32.totalorder %s40, %s56
      %p58 = scmp.eq.s32.totalorder %s20, 0
      %p59 = por %p57, %p58
      %s60 = ssub.s32 %s22, %s29
      %p61 = scmp.eq.s32.totalorder %s60, 0
      %s63 = sadd.s32 %s62, 1
      %s64 = scalar_select %p61, %s62, %s63
      %p67 = pneg %p61
      %p68 = scmp.eq.s32.totalorder %s14, 1
      %p69 = por %p67, %p68
      %p70 = scmp.ne.s32.totalorder %s62, %s65
      %p71 = scmp.eq.s32.totalorder %s14, 0
      %p72 = por %p70, %p71
      %p73 = scmp.ne.s32.totalorder %s62, %s65
      %p74 = scmp.eq.s32.totalorder %s19, 1
      %p75 = por %p73, %p74
      %p76 = scmp.ne.s32.totalorder %s65, %s66
      %p77 = scmp.eq.s32.totalorder %s19, 0
      %p78 = por %p76, %p77
      %p79 = scmp.ne.s32.totalorder %s65, %s66
      %p80 = scmp.eq.s32.totalorder %s20, 1
      %p81 = por %p79, %p80
      %p83 = scmp.ne.s32.totalorder %s66, %s82
      %p84 = scmp.eq.s32.totalorder %s20, 0
      %p85 = por %p83, %p84
      %s86 = ssub.s32 %s22, %s29
      %p87 = scmp.eq.s32.totalorder %s86, 0
      %s89 = sadd.s32 %s88, 1
      %s90 = scalar_select %p87, %s88, %s89
      %p93 = pneg %p87
      %p94 = scmp.eq.s32.totalorder %s14, 1
      %p95 = por %p93, %p94
      %p96 = scmp.ne.s32.totalorder %s88, %s91
      %p97 = scmp.eq.s32.totalorder %s14, 0
      %p98 = por %p96, %p97
      %p99 = scmp.ne.s32.totalorder %s88, %s91
      %p100 = scmp.eq.s32.totalorder %s19, 1
      %p101 = por %p99, %p100
      %p102 = scmp.ne.s32.totalorder %s91, %s92
      %p103 = scmp.eq.s32.totalorder %s19, 0
      %p104 = por %p102, %p103
      %p105 = scmp.ne.s32.totalorder %s91, %s92
      %p106 = scmp.eq.s32.totalorder %s20, 1
      %p107 = por %p105, %p106
      %p109 = scmp.ne.s32.totalorder %s92, %s108
      %p110 = scmp.eq.s32.totalorder %s20, 0
      %p111 = por %p109, %p110
      %s112 = ssub.s32 %s21, %s33
      %p113 = scmp.eq.s32.totalorder %s112, 0
      %s115 = sadd.s32 %s114, 1
      %s116 = scalar_select %p113, %s114, %s115
      %p119 = pneg %p113
      %p120 = scmp.eq.s32.totalorder %s14, 1
      %p121 = por %p119, %p120
      %p122 = scmp.ne.s32.totalorder %s114, %s117
      %p123 = scmp.eq.s32.totalorder %s14, 0
      %p124 = por %p122, %p123
      %p125 = scmp.ne.s32.totalorder %s114, %s117
      %p126 = scmp.eq.s32.totalorder %s19, 1
      %p127 = por %p125, %p126
      %p128 = scmp.ne.s32.totalorder %s117, %s118
      %p129 = scmp.eq.s32.totalorder %s19, 0
      %p130 = por %p128, %p129
      %p131 = scmp.ne.s32.totalorder %s117, %s118
      %p132 = scmp.eq.s32.totalorder %s20, 1
      %p133 = por %p131, %p132
      %p135 = scmp.ne.s32.totalorder %s118, %s134
      %p136 = scmp.eq.s32.totalorder %s20, 0
      %p137 = por %p135, %p136
      %p138 = scmp.le.s32.totalorder 1, %s14
      %p139 = scmp.lt.s32.totalorder %s14, 3
      %p140 = pnand %p138, %p139
      %p141 = pneg %p140
      // Predicated region
      $region9: #{tpu_custom_call.1} parent=5 // pred_check
        _
      $region10: #{tpu_custom_call.1} parent=5 // pred_check_branch
        %143 = sbr.rel (%p140) target = $region12
      $region11: #{tpu_custom_call.1} parent=5 // pred_region
        %s144 = ssub.s32 %s14, 1
        // Predicated region
        $region13: #{tpu_custom_call.1} parent=11 // pred_check
          %p145 = pneg %p52
        $region14: #{tpu_custom_call.1} parent=11 // pred_check_branch
          %147 = sbr.rel (%p145) target = $region16
        $region15: #{tpu_custom_call.1} parent=11 // pred_region
          %s148 = smul.u32 4, %s23
          %s150 = ssub.s32 256, 256
          %151 = vsyncadd [#allocation6], %s150
          %s152 = smul.addr %s148, 64
          %s153 = scalar_lea.hbm %s0, %s152
          %s154 = sshll.u32 [#allocation5], 4
          %s155 = int_to_ptr.vmem [resolvable:$true] %s154
          %160 = dma.hbm_to_vmem [thread:$0]  %s153, 256, %s155, [#allocation6], 64, 64, 4
        $region16: #{tpu_custom_call.1} parent=11 // pred_fallthru
          _
      $region12: #{tpu_custom_call.1} parent=5 // pred_fallthru
        _
      %p161 = scmp.lt.s32.totalorder %s14, 2
      // Predicated region
      $region17: #{tpu_custom_call.1} parent=5 // pred_check
        %p162 = pneg %p161
      $region18: #{tpu_custom_call.1} parent=5 // pred_check_branch
        %164 = sbr.rel (%p162) target = $region20
      $region19: #{tpu_custom_call.1} parent=5 // pred_region
        // Predicated region
        $region21: #{tpu_custom_call.1} parent=19 // pred_check
          %p165 = pneg %p72
        $region22: #{tpu_custom_call.1} parent=19 // pred_check_branch
          %167 = sbr.rel (%p165) target = $region24
        $region23: #{tpu_custom_call.1} parent=19 // pred_region
          %s168 = sand.u32 %s62, 1
          %s169 = scalar_lea.sflag [#allocation9], %s168
          %s170 = sand.u32 %s62, 1
          %s171 = smul.addr %s170, 256
          %s172 = scalar_lea.vmem [#allocation8], %s171
          %s173 = smul.u32 4, %s22
          %s174 = ssub.s32 5, %s173
          %p175 = scmp.lt.s32.totalorder %s174, 4
          %s176 = scalar_select %p175, %s174, 4
          %s177 = smul.u32 1024, %s176
          %s179 = ssub.s32 4096, %s177
          %180 = vsyncadd %s169, %s179
          %p181 = scmp.ne.s32.totalorder 0, %s177
          %s182 = smul.addr %s173, 64
          %s183 = scalar_lea.hbm %s1, %s182
          %s184 = smul.u32 %s176, 4
          %s185 = smul.u32 %s184, 16
          %s186 = sshll.u32 %s172, 4
          %s187 = int_to_ptr.vmem [resolvable:$true] %s186
          %s188 = sshll.u32 %s185, 4
          %192 = dma.hbm_to_vmem [thread:$0]  (%p181), %s183, %s188, %s187, %s169, 320, 256, %s184
        $region24: #{tpu_custom_call.1} parent=19 // pred_fallthru
          _
        // Predicated region
        $region25: #{tpu_custom_call.1} parent=19 // pred_check
          %p193 = pneg %p98
        $region26: #{tpu_custom_call.1} parent=19 // pred_check_branch
          %195 = sbr.rel (%p193) target = $region28
        $region27: #{tpu_custom_call.1} parent=19 // pred_region
          %s196 = smul.u32 4, %s22
          %s197 = ssub.s32 5, %s196
          %p198 = scmp.lt.s32.totalorder %s197, 4
          %s199 = scalar_select %p198, %s197, 4
          %s200 = smul.u32 16, %s199
          %p201 = scmp.lt.s32.totalorder %s196, 4
          %s202 = scalar_select %p201, %s196, 4
          %s203 = scalar_lea.vmem %s2, %s202
          %s204 = smul.u32 4, %s22
          %s205 = ssub.s32 5, %s204
          %p206 = scmp.lt.s32.totalorder %s205, 4
          %s207 = scalar_select %p206, %s205, 4
          %s208 = smul.u32 16, %s207
        $region28: #{tpu_custom_call.1} parent=19 // pred_fallthru
          _
      $region20: #{tpu_custom_call.1} parent=5 // pred_fallthru
        _
      %p209 = scmp.le.s32.totalorder 1, %s14
      %p210 = scmp.lt.s32.totalorder %s14, 3
      %p211 = pnand %p209, %p210
      %p212 = pneg %p211
      // Predicated region
      $region29: #{tpu_custom_call.1} parent=5 // pred_check
        _
      $region30: #{tpu_custom_call.1} parent=5 // pred_check_branch
        %214 = sbr.rel (%p211) target = $region32
      $region31: #{tpu_custom_call.1} parent=5 // pred_region
        %s215 = ssub.s32 %s14, 1
        // Predicated region
        $region33: #{tpu_custom_call.1} parent=31 // pred_check
          %p216 = pneg %p52
        $region34: #{tpu_custom_call.1} parent=31 // pred_check_branch
          %218 = sbr.rel (%p216) target = $region36
        $region35: #{tpu_custom_call.1} parent=31 // pred_region
          %219 = dma.done [#allocation6], 256
        $region36: #{tpu_custom_call.1} parent=31 // pred_fallthru
          _
        %s220 = sand.u32 %s65, 1
        %s221 = scalar_lea.sflag [#allocation9], %s220
        %s222 = sand.u32 %s65, 1
        %s223 = smul.addr %s222, 256
        %s224 = scalar_lea.vmem [#allocation8], %s223
        // Predicated region
        $region37: #{tpu_custom_call.1} parent=31 // pred_check
          %p225 = pneg %p78
        $region38: #{tpu_custom_call.1} parent=31 // pred_check_branch
          %227 = sbr.rel (%p225) target = $region40
        $region39: #{tpu_custom_call.1} parent=31 // pred_region
          %228 = dma.done %s221, 4096
        $region40: #{tpu_custom_call.1} parent=31 // pred_fallthru
          _
        %p229 = pneg %p52
        %p230 = pneg %p49
        %s231 = sand.u32 %s65, 1
        %s232 = scalar_lea.sflag [#allocation9], %s231
        %s233 = sand.u32 %s65, 1
        %s234 = smul.addr %s233, 256
        %s235 = scalar_lea.vmem [#allocation8], %s234
        %p236 = pneg %p78
        %p237 = pneg %p75
        %s238 = smul.u32 4, %s24
        %s239 = ssub.s32 5, %s238
        %p240 = scmp.lt.s32.totalorder %s239, 4
        %s241 = scalar_select %p240, %s239, 4
        %s242 = smul.u32 16, %s241
        %p243 = scmp.lt.s32.totalorder %s238, 4
        %s244 = scalar_select %p243, %s238, 4
        %s245 = scalar_lea.vmem %s2, %s244
        %p246 = pneg %p104
        %p247 = pneg %p101
        %p248 = pneg %p130
        %p249 = pneg %p127
        %s250 = smul.u32 4, %s23
        %s251 = smul.u32 4, %s24
        %s252 = ssub.s32 5, %s251
        %p253 = scmp.lt.s32.totalorder %s252, 4
        %s254 = scalar_select %p253, %s252, 4
        %s255 = smul.u32 1024, %s254
        %s256 = smul.u32 4, %s24
        %s257 = ssub.s32 5, %s256
        %p258 = scmp.lt.s32.totalorder %s257, 4
        %s259 = scalar_select %p258, %s257, 4
        %s260 = smul.u32 16, %s259
        %p261 = scmp.lt.s32.totalorder %s256, 4
        %s262 = scalar_select %p261, %s256, 4
        %s263 = scalar_lea.vmem %s2, %s262
        %s264 = smul.u32 4, %s24
        %s265 = ssub.s32 5, %s264
        %p266 = scmp.lt.s32.totalorder %s265, 4
        %s267 = scalar_select %p266, %s265, 4
        %s268 = smul.u32 16, %s267
        %s269 = smul.u32 4, %s23
        %p271 = scmp.eq.s32.totalorder %s24, 0
        // Predicated region
        $region41: #{tpu_custom_call.1} parent=31 // pred_check
          %p272 = pneg %p271
        $region42: #{tpu_custom_call.1} parent=31 // pred_check_branch
          %274 = sbr.rel (%p272) target = $region44
        $region43: #{tpu_custom_call.1} parent=31 // pred_region
          %vm275 = vcmask 7168
          %276 = vst.msk [vmem:[#allocation3] sm:$0xff] %vm275, -inf
          %277 = vst.msk [vmem:[#allocation3 + $0x8] sm:$0xff] %vm275, -inf
          %278 = vst.msk [vmem:[#allocation3 + $0x10] sm:$0xff] %vm275, -inf
          %279 = vst.msk [vmem:[#allocation3 + $0x18] sm:$0xff] %vm275, -inf
          %280 = vst.msk [vmem:[#allocation4] sm:$0xff] %vm275, 0.0
          %281 = vst.msk [vmem:[#allocation4 + $0x8] sm:$0xff] %vm275, 0.0
          %282 = vst.msk [vmem:[#allocation4 + $0x10] sm:$0xff] %vm275, 0.0
          %283 = vst.msk [vmem:[#allocation4 + $0x18] sm:$0xff] %vm275, 0.0
        $region44: #{tpu_custom_call.1} parent=31 // pred_fallthru
          _
        %v284 = vld [vmem:[#allocation5] sm:$0xf]
        %v285 = vld [vmem:[#allocation5 + $0x4] sm:$0xf]
        %v286 = vld [vmem:[#allocation5 + $0x8] sm:$0xf]
        %v287 = vld [vmem:[#allocation5 + $0xc] sm:$0xf]
        %v288 = vld [vmem:[%s224] sm:$0xff]
        %v289 = vld [vmem:[%s224 + $0x8] sm:$0xff]
        %v290 = vld [vmem:[%s224 + $0x10] sm:$0xff]
        %v291 = vld [vmem:[%s224 + $0x18] sm:$0xff]
        %v292 = vld [vmem:[%s224 + $0x20] sm:$0xff]
        %v293 = vld [vmem:[%s224 + $0x28] sm:$0xff]
        %v294 = vld [vmem:[%s224 + $0x30] sm:$0xff]
        %v295 = vld [vmem:[%s224 + $0x38] sm:$0xff]
        %v296 = vld [vmem:[%s224 + $0x40] sm:$0xff]
        %v297 = vld [vmem:[%s224 + $0x48] sm:$0xff]
        %v298 = vld [vmem:[%s224 + $0x50] sm:$0xff]
        %v299 = vld [vmem:[%s224 + $0x58] sm:$0xff]
        %v300 = vld [vmem:[%s224 + $0x60] sm:$0xff]
        %v301 = vld [vmem:[%s224 + $0x68] sm:$0xff]
        %v302 = vld [vmem:[%s224 + $0x70] sm:$0xff]
        %v303 = vld [vmem:[%s224 + $0x78] sm:$0xff]
        %v304 = vld [vmem:[%s224 + $0x80] sm:$0xff]
        %v305 = vld [vmem:[%s224 + $0x88] sm:$0xff]
        %v306 = vld [vmem:[%s224 + $0x90] sm:$0xff]
        %v307 = vld [vmem:[%s224 + $0x98] sm:$0xff]
        %v308 = vld [vmem:[%s224 + $0xa0] sm:$0xff]
        %v309 = vld [vmem:[%s224 + $0xa8] sm:$0xff]
        %v310 = vld [vmem:[%s224 + $0xb0] sm:$0xff]
        %v311 = vld [vmem:[%s224 + $0xb8] sm:$0xff]
        %v312 = vld [vmem:[%s224 + $0xc0] sm:$0xff]
        %v313 = vld [vmem:[%s224 + $0xc8] sm:$0xff]
        %v314 = vld [vmem:[%s224 + $0xd0] sm:$0xff]
        %v315 = vld [vmem:[%s224 + $0xd8] sm:$0xff]
        %v316 = vld [vmem:[%s224 + $0xe0] sm:$0xff]
        %v317 = vld [vmem:[%s224 + $0xe8] sm:$0xff]
        %v318 = vld [vmem:[%s224 + $0xf0] sm:$0xff]
        %v319 = vld [vmem:[%s224 + $0xf8] sm:$0xff]
        %v320 = vld [vmem:[%s263] sm:$0xf]
        %v322 = vlaneseq
        %v323 = vshrl.u32 %v322, 7
        %v324 = vsub.s32 0, %v323
        %v325 = vrot.slane %v320, %v324
        %v326 = vlaneseq
        %v327 = vshrl.u32 %v326, 7
        %v328 = vsub.s32 1, %v327
        %v329 = vrot.slane %v320, %v328
        %v330 = vlaneseq
        %v331 = vshrl.u32 %v330, 7
        %v332 = vsub.s32 2, %v331
        %v333 = vrot.slane %v320, %v332
        %v334 = vlaneseq
        %v335 = vshrl.u32 %v334, 7
        %v336 = vsub.s32 3, %v335
        %v337 = vrot.slane %v320, %v336
        %v346 = vunpack.c.l.b16 %v284
        %v347 = vunpack.c.l.b16 %v285
        %v348 = vunpack.c.l.b16 %v286
        %v349 = vunpack.c.l.b16 %v287
        %v350 = vpack.c.b16 %v347, %v346
        %v351 = vpack.c.b16 %v349, %v348
        %v386 = vunpack.c.l.b16 %v288
        %v387 = vunpack.c.h.b16 %v288
        %v388 = vunpack.c.l.b16 %v289
        %v389 = vunpack.c.h.b16 %v289
        %v390 = vunpack.c.l.b16 %v290
        %v391 = vunpack.c.h.b16 %v290
        %v392 = vunpack.c.l.b16 %v291
        %v393 = vunpack.c.h.b16 %v291
        %v394 = vunpack.c.l.b16 %v292
        %v395 = vunpack.c.h.b16 %v292
        %v396 = vunpack.c.l.b16 %v293
        %v397 = vunpack.c.h.b16 %v293
        %v398 = vunpack.c.l.b16 %v294
        %v399 = vunpack.c.h.b16 %v294
        %v400 = vunpack.c.l.b16 %v295
        %v401 = vunpack.c.h.b16 %v295
        %v402 = vunpack.c.l.b16 %v296
        %v403 = vunpack.c.h.b16 %v296
        %v404 = vunpack.c.l.b16 %v297
        %v405 = vunpack.c.h.b16 %v297
        %v406 = vunpack.c.l.b16 %v298
        %v407 = vunpack.c.h.b16 %v298
        %v408 = vunpack.c.l.b16 %v299
        %v409 = vunpack.c.h.b16 %v299
        %v410 = vunpack.c.l.b16 %v300
        %v411 = vunpack.c.h.b16 %v300
        %v412 = vunpack.c.l.b16 %v301
        %v413 = vunpack.c.h.b16 %v301
        %v414 = vunpack.c.l.b16 %v302
        %v415 = vunpack.c.h.b16 %v302
        %v416 = vunpack.c.l.b16 %v303
        %v417 = vunpack.c.h.b16 %v303
        %v418 = vunpack.c.l.b16 %v304
        %v419 = vunpack.c.h.b16 %v304
        %v420 = vunpack.c.l.b16 %v305
        %v421 = vunpack.c.h.b16 %v305
        %v422 = vunpack.c.l.b16 %v306
        %v423 = vunpack.c.h.b16 %v306
        %v424 = vunpack.c.l.b16 %v307
        %v425 = vunpack.c.h.b16 %v307
        %v426 = vunpack.c.l.b16 %v308
        %v427 = vunpack.c.h.b16 %v308
        %v428 = vunpack.c.l.b16 %v309
        %v429 = vunpack.c.h.b16 %v309
        %v430 = vunpack.c.l.b16 %v310
        %v431 = vunpack.c.h.b16 %v310
        %v432 = vunpack.c.l.b16 %v311
        %v433 = vunpack.c.h.b16 %v311
        %v434 = vunpack.c.l.b16 %v312
        %v435 = vunpack.c.h.b16 %v312
        %v436 = vunpack.c.l.b16 %v313
        %v437 = vunpack.c.h.b16 %v313
        %v438 = vunpack.c.l.b16 %v314
        %v439 = vunpack.c.h.b16 %v314
        %v440 = vunpack.c.l.b16 %v315
        %v441 = vunpack.c.h.b16 %v315
        %v442 = vunpack.c.l.b16 %v316
        %v443 = vunpack.c.h.b16 %v316
        %v444 = vunpack.c.l.b16 %v317
        %v445 = vunpack.c.h.b16 %v317
        %v446 = vunpack.c.l.b16 %v318
        %v447 = vunpack.c.h.b16 %v318
        %v448 = vunpack.c.l.b16 %v319
        %v449 = vunpack.c.h.b16 %v319
        %v450 = vpack.c.b16 %v390, %v386
        %v451 = vpack.c.b16 %v391, %v387
        %v452 = vpack.c.b16 %v392, %v388
        %v453 = vpack.c.b16 %v393, %v389
        %v454 = vpack.c.b16 %v398, %v394
        %v455 = vpack.c.b16 %v399, %v395
        %v456 = vpack.c.b16 %v400, %v396
        %v457 = vpack.c.b16 %v401, %v397
        %v458 = vpack.c.b16 %v406, %v402
        %v459 = vpack.c.b16 %v407, %v403
        %v460 = vpack.c.b16 %v408, %v404
        %v461 = vpack.c.b16 %v409, %v405
        %v462 = vpack.c.b16 %v414, %v410
        %v463 = vpack.c.b16 %v415, %v411
        %v464 = vpack.c.b16 %v416, %v412
        %v465 = vpack.c.b16 %v417, %v413
        %v466 = vpack.c.b16 %v422, %v418
        %v467 = vpack.c.b16 %v423, %v419
        %v468 = vpack.c.b16 %v424, %v420
        %v469 = vpack.c.b16 %v425, %v421
        %v470 = vpack.c.b16 %v430, %v426
        %v471 = vpack.c.b16 %v431, %v427
        %v472 = vpack.c.b16 %v432, %v428
        %v473 = vpack.c.b16 %v433, %v429
        %v474 = vpack.c.b16 %v438, %v434
        %v475 = vpack.c.b16 %v439, %v435
        %v476 = vpack.c.b16 %v440, %v436
        %v477 = vpack.c.b16 %v441, %v437
        %v478 = vpack.c.b16 %v446, %v442
        %v479 = vpack.c.b16 %v447, %v443
        %v480 = vpack.c.b16 %v448, %v444
        %v481 = vpack.c.b16 %v449, %v445
        %514 = vmatprep.subr.bf16.mxu0 %v451
        %515 = vmatpush1.bf16.msra.mxu0 %v450
        %516 = vmatprep.subr.bf16.mxu0 %v455
        %517 = vmatpush1.bf16.msra.mxu0 %v454
        %518 = vmatprep.subr.bf16.mxu0 %v459
        %519 = vmatpush1.bf16.msra.mxu0 %v458
        %520 = vmatprep.subr.bf16.mxu0 %v463
        %521 = vmatpush1.bf16.msra.mxu0 %v462
        %522 = vmatprep.subr.bf16.mxu0 %v467
        %523 = vmatpush1.bf16.msra.mxu0 %v466
        %524 = vmatprep.subr.bf16.mxu0 %v471
        %525 = vmatpush1.bf16.msra.mxu0 %v470
        %526 = vmatprep.subr.bf16.mxu0 %v475
        %527 = vmatpush1.bf16.msra.mxu0 %v474
        %528 = vmatprep.subr.bf16.mxu0 %v479
        %529 = vmatpush1.bf16.msra.mxu0 %v478
        %530 = vmatprep.subr.bf16.mxu0 0
        %531 = vmatpush1.bf16.msra.mxu0 0
        %532 = vmatprep.subr.bf16.mxu0 0
        %533 = vmatpush1.bf16.msra.mxu0 0
        %534 = vmatprep.subr.bf16.mxu0 0
        %535 = vmatpush1.bf16.msra.mxu0 0
        %536 = vmatprep.subr.bf16.mxu0 0
        %537 = vmatpush1.bf16.msra.mxu0 0
        %538 = vmatprep.subr.bf16.mxu0 0
        %539 = vmatpush1.bf16.msra.mxu0 0
        %540 = vmatprep.subr.bf16.mxu0 0
        %541 = vmatpush1.bf16.msra.mxu0 0
        %542 = vmatprep.subr.bf16.mxu0 0
        %543 = vmatpush1.bf16.msra.mxu0 0
        %544 = vmatprep.subr.bf16.mxu0 0
        %545 = vmatpush1.bf16.msra.mxu0 0
        %546 = vmatprep.mubr.bf16.mxu0 0
        %547 = vmatmul.mubr.bf16.gmra.mrb[0].mxu0 %v350
        %v548 = vpop.f32.mrb[0].mxu0
        %v549 = vadd.f32 %v325, %v548
        %v550 = vpop.f32.mrb[0].mxu0
        %v551 = vadd.f32 %v329, %v550
        %v552 = vpop.f32.mrb[0].mxu0
        %v553 = vadd.f32 %v325, %v552
        %v554 = vpop.f32.mrb[0].mxu0
        %v555 = vadd.f32 %v329, %v554
        %556 = vmatprep.mubr.bf16.mxu0 0
        %557 = vmatmul.mubr.bf16.gmra.mrb[0].mxu0 %v351
        %v558 = vpop.f32.mrb[0].mxu0
        %v559 = vadd.f32 %v325, %v558
        %v560 = vpop.f32.mrb[0].mxu0
        %v561 = vadd.f32 %v329, %v560
        %v562 = vpop.f32.mrb[0].mxu0
        %v563 = vadd.f32 %v325, %v562
        %v564 = vpop.f32.mrb[0].mxu0
        %v565 = vadd.f32 %v329, %v564
        %566 = vdwg.mxu0
        %567 = vmatprep.subr.bf16.mxu0 %v453
        %568 = vmatpush1.bf16.msra.mxu0 %v452
        %569 = vmatprep.subr.bf16.mxu0 %v457
        %570 = vmatpush1.bf16.msra.mxu0 %v456
        %571 = vmatprep.subr.bf16.mxu0 %v461
        %572 = vmatpush1.bf16.msra.mxu0 %v460
        %573 = vmatprep.subr.bf16.mxu0 %v465
        %574 = vmatpush1.bf16.msra.mxu0 %v464
        %575 = vmatprep.subr.bf16.mxu0 %v469
        %576 = vmatpush1.bf16.msra.mxu0 %v468
        %577 = vmatprep.subr.bf16.mxu0 %v473
        %578 = vmatpush1.bf16.msra.mxu0 %v472
        %579 = vmatprep.subr.bf16.mxu0 %v477
        %580 = vmatpush1.bf16.msra.mxu0 %v476
        %581 = vmatprep.subr.bf16.mxu0 %v481
        %582 = vmatpush1.bf16.msra.mxu0 %v480
        %583 = vmatprep.subr.bf16.mxu0 0
        %584 = vmatpush1.bf16.msra.mxu0 0
        %585 = vmatprep.subr.bf16.mxu0 0
        %586 = vmatpush1.bf16.msra.mxu0 0
        %587 = vmatprep.subr.bf16.mxu0 0
        %588 = vmatpush1.bf16.msra.mxu0 0
        %589 = vmatprep.subr.bf16.mxu0 0
        %590 = vmatpush1.bf16.msra.mxu0 0
        %591 = vmatprep.subr.bf16.mxu0 0
        %592 = vmatpush1.bf16.msra.mxu0 0
        %593 = vmatprep.subr.bf16.mxu0 0
        %594 = vmatpush1.bf16.msra.mxu0 0
        %595 = vmatprep.subr.bf16.mxu0 0
        %596 = vmatpush1.bf16.msra.mxu0 0
        %597 = vmatprep.subr.bf16.mxu0 0
        %598 = vmatpush1.bf16.msra.mxu0 0
        %599 = vmatprep.mubr.bf16.mxu0 0
        %600 = vmatmul.mubr.bf16.gmra.mrb[0].mxu0 %v350
        %v601 = vpop.f32.mrb[0].mxu0
        %v602 = vadd.f32 %v333, %v601
        %v603 = vpop.f32.mrb[0].mxu0
        %v604 = vadd.f32 %v337, %v603
        %v605 = vpop.f32.mrb[0].mxu0
        %v606 = vadd.f32 %v333, %v605
        %v607 = vpop.f32.mrb[0].mxu0
        %v608 = vadd.f32 %v337, %v607
        %609 = vmatprep.mubr.bf16.mxu0 0
        %610 = vmatmul.mubr.bf16.gmra.mrb[0].mxu0 %v351
        %v611 = vpop.f32.mrb[0].mxu0
        %v612 = vadd.f32 %v333, %v611
        %v613 = vpop.f32.mrb[0].mxu0
        %v614 = vadd.f32 %v337, %v613
        %v615 = vpop.f32.mrb[0].mxu0
        %v616 = vadd.f32 %v333, %v615
        %v617 = vpop.f32.mrb[0].mxu0
        %v618 = vadd.f32 %v337, %v617
        %619 = vdwg.mxu0
        %s620 = smul.u32 %s24, 512
        %v621 = vlaneseq
        %v622 = vand.u32 %v621, 127
        %v623 = vadd.s32 %v622, 128
        %v624 = vadd.s32 %v622, 256
        %v625 = vadd.s32 %v622, 384
        %v626 = vstv %s620
        %v627 = vadd.s32 %v626, %v622
        %v628 = vadd.s32 %v626, %v623
        %v629 = vadd.s32 %v626, %v624
        %v630 = vadd.s32 %v626, %v625
        %vm631 = vcmp.lt.s32.totalorder %v627, 640
        %vm632 = vcmp.lt.s32.totalorder %v628, 640
        %vm633 = vcmp.lt.s32.totalorder %v629, 640
        %vm634 = vcmp.lt.s32.totalorder %v630, 640
        %v635 = vsel %vm631, %v549, -1e+30
        %v636 = vsel %vm632, %v551, -1e+30
        %v637 = vsel %vm633, %v602, -1e+30
        %v638 = vsel %vm634, %v604, -1e+30
        %v639 = vsel %vm631, %v553, -1e+30
        %v640 = vsel %vm632, %v555, -1e+30
        %v641 = vsel %vm633, %v606, -1e+30
        %v642 = vsel %vm634, %v608, -1e+30
        %v643 = vsel %vm631, %v559, -1e+30
        %v644 = vsel %vm632, %v561, -1e+30
        %v645 = vsel %vm633, %v612, -1e+30
        %v646 = vsel %vm634, %v614, -1e+30
        %v647 = vsel %vm631, %v563, -1e+30
        %v648 = vsel %vm632, %v565, -1e+30
        %v649 = vsel %vm633, %v616, -1e+30
        %v650 = vsel %vm634, %v618, -1e+30
        %s651 = sshra.s32 %s620, 7
        %s652 = sand.u32 %s620, 127
        %s653 = smul.addr %s651, 8
        %s654 = scalar_lea.vmem [#allocation2], %s653
        %655 = vst [vmem:[%s654] sm:$0xff] %v635
        %656 = vst [vmem:[%s654 + $0x8] sm:$0xff] %v636
        %657 = vst [vmem:[%s654 + $0x10] sm:$0xff] %v637
        %658 = vst [vmem:[%s654 + $0x18] sm:$0xff] %v638
        %659 = vst [vmem:[%s654 + $0x40] sm:$0xff] %v639
        %660 = vst [vmem:[%s654 + $0x48] sm:$0xff] %v640
        %661 = vst [vmem:[%s654 + $0x50] sm:$0xff] %v641
        %662 = vst [vmem:[%s654 + $0x58] sm:$0xff] %v642
        %663 = vst [vmem:[%s654 + $0x80] sm:$0xff] %v643
        %664 = vst [vmem:[%s654 + $0x88] sm:$0xff] %v644
        %665 = vst [vmem:[%s654 + $0x90] sm:$0xff] %v645
        %666 = vst [vmem:[%s654 + $0x98] sm:$0xff] %v646
        %667 = vst [vmem:[%s654 + $0xc0] sm:$0xff] %v647
        %668 = vst [vmem:[%s654 + $0xc8] sm:$0xff] %v648
        %669 = vst [vmem:[%s654 + $0xd0] sm:$0xff] %v649
        %670 = vst [vmem:[%s654 + $0xd8] sm:$0xff] %v650
        %v671 = vld [vmem:[#allocation3] sm:$0xff]
        %v672 = vld [vmem:[#allocation3 + $0x8] sm:$0xff]
        %v673 = vld [vmem:[#allocation3 + $0x10] sm:$0xff]
        %v674 = vld [vmem:[#allocation3 + $0x18] sm:$0xff]
        %v675 = vmax.f32 %v635, %v636
        %v676 = vmax.f32 %v675, %v637
        %v677 = vmax.f32 %v676, %v638
        %678 = vmax.xlane.f32.xlu0 %v677
        %v679 = vpop.xlane.xlu0 %678
        %v680 = vmax.f32 %v639, %v640
        %v681 = vmax.f32 %v680, %v641
        %v682 = vmax.f32 %v681, %v642
        %683 = vmax.xlane.f32.xlu0 %v682
        %v684 = vpop.xlane.xlu0 %683
        %v685 = vmax.f32 %v643, %v644
        %v686 = vmax.f32 %v685, %v645
        %v687 = vmax.f32 %v686, %v646
        %688 = vmax.xlane.f32.xlu0 %v687
        %v689 = vpop.xlane.xlu0 %688
        %v690 = vmax.f32 %v647, %v648
        %v691 = vmax.f32 %v690, %v649
        %v692 = vmax.f32 %v691, %v650
        %693 = vmax.xlane.f32.xlu0 %v692
        %v694 = vpop.xlane.xlu0 %693
        %v695 = vmax.f32 %v671, %v679
        %v696 = vmax.f32 %v672, %v684
        %v697 = vmax.f32 %v673, %v689
        %v698 = vmax.f32 %v674, %v694
        %v699 = vld [vmem:[#allocation4] sm:$0xff]
        %v700 = vld [vmem:[#allocation4 + $0x8] sm:$0xff]
        %v701 = vld [vmem:[#allocation4 + $0x10] sm:$0xff]
        %v702 = vld [vmem:[#allocation4 + $0x18] sm:$0xff]
        %v703 = vsub.f32 %v671, %v695
        %v704 = vsub.f32 %v672, %v696
        %v705 = vsub.f32 %v673, %v697
        %v706 = vsub.f32 %v674, %v698
        %v707 = vmul.f32 %v703, 1.442695
        %v708 = vpow.pop %v707
        %v709 = vmul.f32 %v704, 1.442695
        %v710 = vpow.pop %v709
        %v711 = vmul.f32 %v705, 1.442695
        %v712 = vpow.pop %v711
        %v713 = vmul.f32 %v706, 1.442695
        %v714 = vpow.pop %v713
        %v715 = vmul.f32 %v699, %v708
        %v716 = vmul.f32 %v700, %v710
        %v717 = vmul.f32 %v701, %v712
        %v718 = vmul.f32 %v702, %v714
        %720 = vset.pattern.permute.xlu0 0
        %721 = vperm.xlu0 %720, %v695
        %v722 = vpop.permute.xlu0 %721
        %725 = vset.pattern.permute.xlu0 0
        %726 = vperm.xlu0 %725, %v696
        %v727 = vpop.permute.xlu0 %726
        %730 = vset.pattern.permute.xlu0 0
        %731 = vperm.xlu0 %730, %v697
        %v732 = vpop.permute.xlu0 %731
        %735 = vset.pattern.permute.xlu0 0
        %736 = vperm.xlu0 %735, %v698
        %v737 = vpop.permute.xlu0 %736
        %v739 = vsub.f32 %v635, %v722
        %v740 = vsub.f32 %v636, %v722
        %v741 = vsub.f32 %v637, %v722
        %v742 = vsub.f32 %v638, %v722
        %v743 = vsub.f32 %v639, %v727
        %v744 = vsub.f32 %v640, %v727
        %v745 = vsub.f32 %v641, %v727
        %v746 = vsub.f32 %v642, %v727
        %v747 = vsub.f32 %v643, %v732
        %v748 = vsub.f32 %v644, %v732
        %v749 = vsub.f32 %v645, %v732
        %v750 = vsub.f32 %v646, %v732
        %v751 = vsub.f32 %v647, %v737
        %v752 = vsub.f32 %v648, %v737
        %v753 = vsub.f32 %v649, %v737
        %v754 = vsub.f32 %v650, %v737
        %v755 = vmul.f32 %v739, 1.442695
        %v756 = vpow.pop %v755
        %v757 = vmul.f32 %v740, 1.442695
        %v758 = vpow.pop %v757
        %v759 = vmul.f32 %v741, 1.442695
        %v760 = vpow.pop %v759
        %v761 = vmul.f32 %v742, 1.442695
        %v762 = vpow.pop %v761
        %v763 = vmul.f32 %v743, 1.442695
        %v764 = vpow.pop %v763
        %v765 = vmul.f32 %v744, 1.442695
        %v766 = vpow.pop %v765
        %v767 = vmul.f32 %v745, 1.442695
        %v768 = vpow.pop %v767
        %v769 = vmul.f32 %v746, 1.442695
        %v770 = vpow.pop %v769
        %v771 = vmul.f32 %v747, 1.442695
        %v772 = vpow.pop %v771
        %v773 = vmul.f32 %v748, 1.442695
        %v774 = vpow.pop %v773
        %v775 = vmul.f32 %v749, 1.442695
        %v776 = vpow.pop %v775
        %v777 = vmul.f32 %v750, 1.442695
        %v778 = vpow.pop %v777
        %v779 = vmul.f32 %v751, 1.442695
        %v780 = vpow.pop %v779
        %v781 = vmul.f32 %v752, 1.442695
        %v782 = vpow.pop %v781
        %v783 = vmul.f32 %v753, 1.442695
        %v784 = vpow.pop %v783
        %v785 = vmul.f32 %v754, 1.442695
        %v786 = vpow.pop %v785
        %v787 = vadd.f32 %v756, %v758
        %v788 = vadd.f32 %v787, %v760
        %v789 = vadd.f32 %v788, %v762
        %790 = vadd.xlane.f32.xlu0 %v789
        %v791 = vpop.xlane.xlu0 %790
        %v792 = vadd.f32 %v764, %v766
        %v793 = vadd.f32 %v792, %v768
        %v794 = vadd.f32 %v793, %v770
        %795 = vadd.xlane.f32.xlu0 %v794
        %v796 = vpop.xlane.xlu0 %795
        %v797 = vadd.f32 %v772, %v774
        %v798 = vadd.f32 %v797, %v776
        %v799 = vadd.f32 %v798, %v778
        %800 = vadd.xlane.f32.xlu0 %v799
        %v801 = vpop.xlane.xlu0 %800
        %v802 = vadd.f32 %v780, %v782
        %v803 = vadd.f32 %v802, %v784
        %v804 = vadd.f32 %v803, %v786
        %805 = vadd.xlane.f32.xlu0 %v804
        %v806 = vpop.xlane.xlu0 %805
        %v807 = vadd.f32 %v715, %v791
        %v808 = vadd.f32 %v716, %v796
        %v809 = vadd.f32 %v717, %v801
        %v810 = vadd.f32 %v718, %v806
        %vm811 = vcmask 7168
        %812 = vst.msk [vmem:[#allocation4] sm:$0xff] %vm811, %v807
        %813 = vst.msk [vmem:[#allocation4 + $0x8] sm:$0xff] %vm811, %v808
        %814 = vst.msk [vmem:[#allocation4 + $0x10] sm:$0xff] %vm811, %v809
        %815 = vst.msk [vmem:[#allocation4 + $0x18] sm:$0xff] %vm811, %v810
        %816 = vst.msk [vmem:[#allocation3] sm:$0xff] %vm811, %v695
        %817 = vst.msk [vmem:[#allocation3 + $0x8] sm:$0xff] %vm811, %v696
        %818 = vst.msk [vmem:[#allocation3 + $0x10] sm:$0xff] %vm811, %v697
        %819 = vst.msk [vmem:[#allocation3 + $0x18] sm:$0xff] %vm811, %v698
        %p820 = scmp.eq.s32.totalorder %s24, 1
        // Predicated region
        $region45: #{tpu_custom_call.1} parent=31 // pred_check
          %p821 = pneg %p820
        $region46: #{tpu_custom_call.1} parent=31 // pred_check_branch
          %823 = sbr.rel (%p821) target = $region48
        $region47: #{tpu_custom_call.1} parent=31 // pred_region
          %v824 = vld [vmem:[#allocation3] sm:$0xff]
          %v825 = vld [vmem:[#allocation3 + $0x8] sm:$0xff]
          %v826 = vld [vmem:[#allocation3 + $0x10] sm:$0xff]
          %v827 = vld [vmem:[#allocation3 + $0x18] sm:$0xff]
          %v828 = vld [vmem:[#allocation4] sm:$0xff]
          %v829 = vld [vmem:[#allocation4 + $0x8] sm:$0xff]
          %v830 = vld [vmem:[#allocation4 + $0x10] sm:$0xff]
          %v831 = vld [vmem:[#allocation4 + $0x18] sm:$0xff]
          %v832 = vlog2.pop %v828
          %v833 = vmul.f32 %v832, 0.6931472
          %v834 = vlog2.pop %v829
          %v835 = vmul.f32 %v834, 0.6931472
          %v836 = vlog2.pop %v830
          %v837 = vmul.f32 %v836, 0.6931472
          %v838 = vlog2.pop %v831
          %v839 = vmul.f32 %v838, 0.6931472
          %v840 = vadd.f32 %v824, %v833
          %v841 = vadd.f32 %v825, %v835
          %v842 = vadd.f32 %v826, %v837
          %v843 = vadd.f32 %v827, %v839
          %v844 = vld [vmem:[#allocation2] sm:$0xff]
          %v845 = vld [vmem:[#allocation2 + $0x8] sm:$0xff]
          %v846 = vld [vmem:[#allocation2 + $0x10] sm:$0xff]
          %v847 = vld [vmem:[#allocation2 + $0x18] sm:$0xff]
          %v848 = vld [vmem:[#allocation2 + $0x20] sm:$0xff]
          %v849 = vld [vmem:[#allocation2 + $0x40] sm:$0xff]
          %v850 = vld [vmem:[#allocation2 + $0x48] sm:$0xff]
          %v851 = vld [vmem:[#allocation2 + $0x50] sm:$0xff]
          %v852 = vld [vmem:[#allocation2 + $0x58] sm:$0xff]
          %v853 = vld [vmem:[#allocation2 + $0x60] sm:$0xff]
          %v854 = vld [vmem:[#allocation2 + $0x80] sm:$0xff]
          %v855 = vld [vmem:[#allocation2 + $0x88] sm:$0xff]
          %v856 = vld [vmem:[#allocation2 + $0x90] sm:$0xff]
          %v857 = vld [vmem:[#allocation2 + $0x98] sm:$0xff]
          %v858 = vld [vmem:[#allocation2 + $0xa0] sm:$0xff]
          %v859 = vld [vmem:[#allocation2 + $0xc0] sm:$0xff]
          %v860 = vld [vmem:[#allocation2 + $0xc8] sm:$0xff]
          %v861 = vld [vmem:[#allocation2 + $0xd0] sm:$0xff]
          %v862 = vld [vmem:[#allocation2 + $0xd8] sm:$0xff]
          %v863 = vld [vmem:[#allocation2 + $0xe0] sm:$0xff]
          %865 = vset.pattern.permute.xlu0 0
          %866 = vperm.xlu0 %865, %v840
          %v867 = vpop.permute.xlu0 %866
          %870 = vset.pattern.permute.xlu0 0
          %871 = vperm.xlu0 %870, %v841
          %v872 = vpop.permute.xlu0 %871
          %875 = vset.pattern.permute.xlu0 0
          %876 = vperm.xlu0 %875, %v842
          %v877 = vpop.permute.xlu0 %876
          %880 = vset.pattern.permute.xlu0 0
          %881 = vperm.xlu0 %880, %v843
          %v882 = vpop.permute.xlu0 %881
          %v884 = vsub.f32 %v844, %v867
          %v885 = vsub.f32 %v845, %v867
          %v886 = vsub.f32 %v846, %v867
          %v887 = vsub.f32 %v847, %v867
          %v888 = vsub.f32 %v848, %v867
          %v889 = vsub.f32 %v849, %v872
          %v890 = vsub.f32 %v850, %v872
          %v891 = vsub.f32 %v851, %v872
          %v892 = vsub.f32 %v852, %v872
          %v893 = vsub.f32 %v853, %v872
          %v894 = vsub.f32 %v854, %v877
          %v895 = vsub.f32 %v855, %v877
          %v896 = vsub.f32 %v856, %v877
          %v897 = vsub.f32 %v857, %v877
          %v898 = vsub.f32 %v858, %v877
          %v899 = vsub.f32 %v859, %v882
          %v900 = vsub.f32 %v860, %v882
          %v901 = vsub.f32 %v861, %v882
          %v902 = vsub.f32 %v862, %v882
          %v903 = vsub.f32 %v863, %v882
          %904 = vst [vmem:[#allocation10] sm:$0xff] %v884
          %905 = vst [vmem:[#allocation10 + $0x8] sm:$0xff] %v885
          %906 = vst [vmem:[#allocation10 + $0x10] sm:$0xff] %v886
          %907 = vst [vmem:[#allocation10 + $0x18] sm:$0xff] %v887
          %908 = vst [vmem:[#allocation10 + $0x20] sm:$0xff] %v888
          %909 = vst [vmem:[#allocation10 + $0x28] sm:$0xff] %v889
          %910 = vst [vmem:[#allocation10 + $0x30] sm:$0xff] %v890
          %911 = vst [vmem:[#allocation10 + $0x38] sm:$0xff] %v891
          %912 = vst [vmem:[#allocation10 + $0x40] sm:$0xff] %v892
          %913 = vst [vmem:[#allocation10 + $0x48] sm:$0xff] %v893
          %914 = vst [vmem:[#allocation10 + $0x50] sm:$0xff] %v894
          %915 = vst [vmem:[#allocation10 + $0x58] sm:$0xff] %v895
          %916 = vst [vmem:[#allocation10 + $0x60] sm:$0xff] %v896
          %917 = vst [vmem:[#allocation10 + $0x68] sm:$0xff] %v897
          %918 = vst [vmem:[#allocation10 + $0x70] sm:$0xff] %v898
          %919 = vst [vmem:[#allocation10 + $0x78] sm:$0xff] %v899
          %920 = vst [vmem:[#allocation10 + $0x80] sm:$0xff] %v900
          %921 = vst [vmem:[#allocation10 + $0x88] sm:$0xff] %v901
          %922 = vst [vmem:[#allocation10 + $0x90] sm:$0xff] %v902
          %923 = vst [vmem:[#allocation10 + $0x98] sm:$0xff] %v903
        $region48: #{tpu_custom_call.1} parent=31 // pred_fallthru
          _
        // Predicated region
        $region49: #{tpu_custom_call.1} parent=31 // pred_check
          %p924 = pneg %p127
        $region50: #{tpu_custom_call.1} parent=31 // pred_check_branch
          %926 = sbr.rel (%p924) target = $region52
        $region51: #{tpu_custom_call.1} parent=31 // pred_region
          %s927 = smul.u32 4, %s23
          %s929 = ssub.s32 2560, 2560
          %930 = vsyncadd [#allocation7], %s929
          %s931 = smul.addr %s927, 5
          %s932 = smul.addr %s931, 128
          %s933 = scalar_lea.hbm %s3, %s932
          %s934 = sshll.u32 [#allocation10], 4
          %s935 = int_to_ptr.vmem [resolvable:$true] %s934
          %940 = dma.vmem_to_hbm [thread:$0]  %s935, 2560, %s933, [#allocation7], 640, 640, 40
        $region52: #{tpu_custom_call.1} parent=31 // pred_fallthru
          _
        // Predicated region
        $region53: #{tpu_custom_call.1} parent=31 // pred_check
          %p941 = pneg %p127
        $region54: #{tpu_custom_call.1} parent=31 // pred_check_branch
          %943 = sbr.rel (%p941) target = $region56
        $region55: #{tpu_custom_call.1} parent=31 // pred_region
          %944 = dma.done [#allocation7], 2560
        $region56: #{tpu_custom_call.1} parent=31 // pred_fallthru
          _
      $region32: #{tpu_custom_call.1} parent=5 // pred_fallthru
        _
      %p945 = scmp.le.s32.totalorder 2, %s14
      // Predicated region
      $region57: #{tpu_custom_call.1} parent=5 // pred_check
        %p946 = pneg %p945
      $region58: #{tpu_custom_call.1} parent=5 // pred_check_branch
        %948 = sbr.rel (%p946) target = $region60
      $region59: #{tpu_custom_call.1} parent=5 // pred_region
        %s949 = ssub.s32 %s14, 2
      $region60: #{tpu_custom_call.1} parent=5 // pred_fallthru
        _
    $region6: #{tpu_custom_call.1} parent=1 // loop_footer
      %s18 = sadd.s32 1, %s14
    $region7: #{tpu_custom_call.1} parent=1 // loop_footer_branch
      %13 = sbr.rel target = $region3
    $region8: #{tpu_custom_call.1} parent=1 // loop_exit
      _
    %950 = vsyncpa [#allocation6], 1
    %s951 = scalar_lea.sflag [#allocation6], 1
    %952 = vsyncpa %s951, 1
    %953 = vsyncpa [#allocation9], 1
    %s954 = scalar_lea.sflag [#allocation9], 1
    %955 = vsyncpa %s954, 1
    %956 = vsyncpa [#allocation7], 1
    %s957 = scalar_lea.sflag [#allocation7], 1
    %958 = vsyncpa %s957, 1

</llo_original>
